<compile_context>
chip_gen: v7x
topology: tpu7x:2x2x1
jax: 0.10.0
libtpu: 0.0.40
codegen_flags: <defaults>
</compile_context>

<pallas_src>
import numpy as np
import jax
import jax.numpy as jnp
from jax.experimental import pallas as pl
from jax.experimental.pallas import tpu as pltpu


def _reflect_src_indices(out_size: int, up_size: int, pad_lo: int) -> np.ndarray:
    """Source index (in the 2x-upsampled plane) for each output position, matching
    nn.ReflectionPad2d semantics (negative pad = crop also works)."""
    idx = np.arange(out_size) - pad_lo
    idx = np.abs(idx)                                              # reflect at low edge
    idx = np.where(idx >= up_size, 2 * (up_size - 1) - idx, idx)   # reflect at high edge
    return (idx // 2).astype(np.int64)      # nearest 2x upsample: u -> u // 2


def _fused_selection_matrix(h1, w1, h2, w2, top, left, dtype):
    """One-hot S with S[h*W2 + w, i*W1 + j] = 1 iff out[i, j] sources x2[h, w]."""
    row_src = _reflect_src_indices(h1, 2 * h2, top)       # (H1,) values in [0, H2)
    col_src = _reflect_src_indices(w1, 2 * w2, left)      # (W1,) values in [0, W2)
    src_flat = (row_src[:, None] * w2 + col_src[None, :]).reshape(-1)   # (H1*W1,)
    s = np.zeros((h2 * w2, h1 * w1), dtype=np.float32)
    s[src_flat, np.arange(h1 * w1)] = 1.0
    return jnp.asarray(s, dtype=dtype)       # 0/1 values are exact in bf16/f32 alike


def _fused_select_kernel(x_ref, s_ref, o_ref):
    # x_ref: (B, K) flattened planes, s_ref: (K, TJ) one-hot selector, o_ref: (B, TJ).
    # One-hot selector + f32 MXU accumulation => the matmul is an exact gather.
    o_ref[...] = jnp.dot(
        x_ref[...], s_ref[...], preferred_element_type=jnp.float32
    ).astype(o_ref.dtype)


def _pick_blocks(nc, k, m, itemsize, budget_bytes=24 * 1024 * 1024):
    """Pick (planes-per-step B, output-lane tile TJ) so double-buffered VMEM use stays
    well under the default scoped limit on every TPU generation (incl. v7x)."""
    tj = m if m <= 4096 else 4096                 # 4096 is a multiple of 128
    b = nc if nc <= 512 else 512                  # 512 is a multiple of 8

    def est(b_, tj_):
        # double-buffered x-tile + selector-tile + output-tile
        return 2 * (b_ * k + k * tj_ + b_ * tj_) * itemsize

    while est(b, tj) > budget_bytes and b > 8:
        b = max(8, ((b // 2) // 8) * 8)
    while est(b, tj) > budget_bytes and tj > 128:
        tj = max(128, ((tj // 2) // 128) * 128)
    # TODO(synk): for extremely large spatial sizes (K * TJ still over budget) a
    # separable R @ x @ C two-stage formulation would be needed; not required at
    # detectron2 fusion feature-map scales.
    return b, tj


def upsample_reshape_eval(x1: jax.Array, x2: jax.Array) -> jax.Array:
    """Matches UpsampleReshape_eval.forward(x1, x2). x1 is used only for its shape."""
    _, _, h1, w1 = x1.shape
    n2, c2, h2, w2 = x2.shape
    h_up, w_up = 2 * h2, 2 * w2

    # Padding amounts computed exactly as in the PyTorch module (static here).
    left = right = top = bot = 0
    if w1 != w_up:
        lr = w1 - w_up
        if lr % 2 == 0:
            left = int(lr / 2); right = int(lr / 2)
        else:
            left = int(lr / 2); right = int(lr - left)
    if h1 != h_up:
        tb = h1 - h_up
        if tb % 2 == 0:
            top = int(tb / 2); bot = int(tb / 2)
        else:
            top = int(tb / 2); bot = int(tb - top)

    out_h = h_up + top + bot
    out_w = w_up + left + right

    nc = n2 * c2
    k = h2 * w2
    m = out_h * out_w

    s_mat = _fused_selection_matrix(out_h, out_w, h2, w2, top, left, x2.dtype)
    x_flat = x2.reshape(nc, k)

    itemsize = jnp.dtype(x2.dtype).itemsize
    b, tj = _pick_blocks(nc, k, m, itemsize)

    out_flat = pl.pallas_call(
        _fused_select_kernel,
        out_shape=jax.ShapeDtypeStruct((nc, m), x2.dtype),
        grid=(pl.cdiv(nc, b), pl.cdiv(m, tj)),
        in_specs=[
            pl.BlockSpec((b, k), lambda i, j: (i, 0)),    # planes: blocked over N*C
            pl.BlockSpec((k, tj), lambda i, j: (0, j)),   # selector: resident, lane-tiled
        ],
        out_specs=pl.BlockSpec((b, tj), lambda i, j: (i, j)),
        compiler_params=pltpu.CompilerParams(
            dimension_semantics=("parallel", "parallel"),
        ),
        cost_estimate=pl.CostEstimate(
            flops=2 * nc * k * m,
            transcendentals=0,
            bytes_accessed=(nc * k + k * m + nc * m) * itemsize,
        ),
    )(x_flat, s_mat)

    return out_flat.reshape(n2, c2, out_h, out_w)


if __name__ == "__main__":
    key = jax.random.PRNGKey(0)
    k1, k2 = jax.random.split(key)

    # x1: (2, 4, 16, 16); x2: (2, 4, 7, 7) -> 2x upsample to 14x14, reflect-pad 1 each side.
    x1 = jax.random.normal(k1, (2, 4, 16, 16), dtype=jnp.float32)
    x2 = jax.random.normal(k2, (2, 4, 7, 7), dtype=jnp.float32)

    out = upsample_reshape_eval(x1, x2)
    out = jax.block_until_ready(out)

    # Pure-JAX reference: nearest 2x upsample + reflection pad.
    x2_up = jnp.repeat(jnp.repeat(x2, 2, axis=2), 2, axis=3)
    ref = jnp.pad(x2_up, ((0, 0), (0, 0), (1, 1), (1, 1)), mode="reflect")

    assert out.shape == x1.shape, (out.shape, x1.shape)
    err = float(jnp.max(jnp.abs(out - ref)))
    assert err < 1e-6, f"max abs err {err}"

    print("KERNEL_OK")
</pallas_src>

<mosaic_0001>
module attributes {stable_mosaic.version = 11 : i64} {
  func.func @_fused_select_kernel(%arg0: i32, %arg1: i32, %arg2: memref<8x49xf32, #tpu.memory_space<vmem>>, %arg3: memref<49x256xf32, #tpu.memory_space<vmem>>, %arg4: memref<8x256xf32, #tpu.memory_space<vmem>>) attributes {dimension_semantics = [#tpu.dimension_semantics<parallel>, #tpu.dimension_semantics<parallel>], iteration_bounds = array<i64: 1, 1>, scalar_prefetch = 0 : i64, scratch_operands = 0 : i64, tpu.core_type = #tpu.core_type<tc>, window_params = [{transform_indices = @transform_0, window_bounds = array<i64: 8, 49>}, {transform_indices = @transform_1, window_bounds = array<i64: 49, 256>}, {transform_indices = @transform_2, window_bounds = array<i64: 8, 256>}]} {
    %c0 = arith.constant 0 : index
    %c0_0 = arith.constant 0 : index
    %0 = vector.load %arg2[%c0, %c0_0] : memref<8x49xf32, #tpu.memory_space<vmem>>, vector<8x49xf32>
    %c0_1 = arith.constant 0 : index
    %c0_2 = arith.constant 0 : index
    %1 = vector.load %arg3[%c0_1, %c0_2] : memref<49x256xf32, #tpu.memory_space<vmem>>, vector<49x256xf32>
    %cst = arith.constant dense<0.000000e+00> : vector<8x256xf32>
    %2 = tpu.matmul %0, %1, %cst {dimension_numbers = #tpu.dot_dimension_numbers<[1], [0], [0], [1], [0, 0, 1, 1], [], []>} : vector<8x49xf32>, vector<49x256xf32>, vector<8x256xf32> -> vector<8x256xf32>
    %c0_3 = arith.constant 0 : index
    %c0_4 = arith.constant 0 : index
    %3 = vector.load %arg4[%c0_3, %c0_4] : memref<8x256xf32, #tpu.memory_space<vmem>>, vector<8x256xf32>
    tpu.vector_store %arg4[%c0_3, %c0_4], %2 {strides = array<i32>} : memref<8x256xf32, #tpu.memory_space<vmem>>, vector<8x256xf32>,
    return
  }
  func.func @transform_0(%arg0: i32, %arg1: i32) -> (i32, i32) {
    %c0_i32 = arith.constant 0 : i32
    %c0_i32_0 = arith.constant 0 : i32
    return %arg0, %c0_i32 : i32, i32
  }
  func.func @transform_1(%arg0: i32, %arg1: i32) -> (i32, i32) {
    %c0_i32 = arith.constant 0 : i32
    %c0_i32_0 = arith.constant 0 : i32
    return %c0_i32, %arg1 : i32, i32
  }
  func.func @transform_2(%arg0: i32, %arg1: i32) -> (i32, i32) {
    %c0_i32 = arith.constant 0 : i32
    return %arg0, %arg1 : i32, i32
  }
}

</mosaic_0001>

<llo_original>
// kernel: tpu_custom_call.1
$region0: #{tpu_custom_call.1}
  #allocation0 [shape = 'u32[]', space=smem, size = 0x4, offset = 0x4, fixed_abs, tag = 'smem constant byte address 0x4 - core index']
  #allocation1 [shape = 'u32[144,128]{1,0:T(1,128)}', space=vmem, size = 0x12000, scoped, tag = 'internal scratch']
  %s0 = inlined_call_operand.hbm [shape: f32[8,49], index: 0, kind: input, shape index: {}]
  %s1 = inlined_call_operand.hbm [shape: f32[49,256], index: 1, kind: input, shape index: {}]
  %s2 = inlined_call_operand.hbm [shape: f32[8,256], index: 2, kind: output, shape index: {}]
  %s3 = sld [smem:[#allocation0]]
  $region26: #{tpu_custom_call.1} parent=0
    _
  %s5 = ssub.s32 1, %s3
  %s6 = scalar_select 0, %s5, %s3
  $region1: #{tpu_custom_call.1} parent=0
    #allocation2 [shape = 'u8[4096]{0}', space=vmem, size = 0x1000, scoped, tag = 'input window, operand 0, single buffered']
    #allocation3 [shape = 's32[1]{0}', space=sflag, size = 0x4, scoped, tag = 'scoped memory for tpu_custom_call.1']
    #allocation4 [shape = 's32[1]{0}', space=sflag, size = 0x4, scoped, tag = 'scoped memory for tpu_custom_call.1']
    #allocation5 [shape = 'u8[57344]{0}', space=vmem, size = 0xe000, scoped, tag = 'input window, operand 1, single buffered']
    #allocation6 [shape = 's32[1]{0}', space=sflag, size = 0x4, scoped, tag = 'scoped memory for tpu_custom_call.1']
    #allocation7 [shape = 'u8[8192]{0}', space=vmem, size = 0x2000, scoped, tag = 'output window, operand 0, single buffered']
    %7 = vsyncpa [#allocation3], 0
    %8 = vsyncpa [#allocation6], 0
    %9 = vsyncpa [#allocation4], 0
    // Predicated region
    $region2: #{tpu_custom_call.1} parent=1 // pred_check
      _
    $region3: #{tpu_custom_call.1} parent=1 // pred_check_branch
      %11 = sbr.rel (0) target = $region5
    $region4: #{tpu_custom_call.1} parent=1 // pred_region
      %s13 = ssub.s32 128, 128
      %14 = vsyncadd [#allocation3], %s13
      %s16 = sshll.u32 [#allocation2], 4
      %s17 = int_to_ptr.vmem [resolvable:$true] %s16
      %19 = dma.hbm_to_vmem [thread:$0]  %s0, 128, %s17, [#allocation3]
    $region5: #{tpu_custom_call.1} parent=1 // pred_fallthru
      _
    // Predicated region
    $region6: #{tpu_custom_call.1} parent=1 // pred_check
      _
    $region7: #{tpu_custom_call.1} parent=1 // pred_check_branch
      %21 = sbr.rel (0) target = $region9
    $region8: #{tpu_custom_call.1} parent=1 // pred_region
      %s23 = ssub.s32 1792, 1792
      %24 = vsyncadd [#allocation6], %s23
      %s25 = sshll.u32 [#allocation5], 4
      %s26 = int_to_ptr.vmem [resolvable:$true] %s25
      %31 = dma.hbm_to_vmem [thread:$0]  %s1, 1792, %s26, [#allocation6], 256, 256, 16
    $region9: #{tpu_custom_call.1} parent=1 // pred_fallthru
      _
    // Predicated region
    $region10: #{tpu_custom_call.1} parent=1 // pred_check
      _
    $region11: #{tpu_custom_call.1} parent=1 // pred_check_branch
      %33 = sbr.rel (0) target = $region13
    $region12: #{tpu_custom_call.1} parent=1 // pred_region
      %34 = dma.done [#allocation3], 128
    $region13: #{tpu_custom_call.1} parent=1 // pred_fallthru
      _
    // Predicated region
    $region14: #{tpu_custom_call.1} parent=1 // pred_check
      _
    $region15: #{tpu_custom_call.1} parent=1 // pred_check_branch
      %36 = sbr.rel (0) target = $region17
    $region16: #{tpu_custom_call.1} parent=1 // pred_region
      %37 = dma.done [#allocation6], 1792
    $region17: #{tpu_custom_call.1} parent=1 // pred_fallthru
      _
    %v38 = vld [vmem:[#allocation2] sm:$0xff]
    %v39 = vld [vmem:[#allocation5] sm:$0xff]
    %v40 = vld [vmem:[#allocation5 + $0x8] sm:$0xff]
    %v41 = vld [vmem:[#allocation5 + $0x10] sm:$0xff]
    %v42 = vld [vmem:[#allocation5 + $0x18] sm:$0xff]
    %v43 = vld [vmem:[#allocation5 + $0x20] sm:$0xff]
    %v44 = vld [vmem:[#allocation5 + $0x28] sm:$0xff]
    %v45 = vld [vmem:[#allocation5 + $0x30] sm:$0xff]
    %v46 = vld [vmem:[#allocation5 + $0x38] sm:$0xff]
    %v47 = vld [vmem:[#allocation5 + $0x40] sm:$0xff]
    %v48 = vld [vmem:[#allocation5 + $0x48] sm:$0xff]
    %v49 = vld [vmem:[#allocation5 + $0x50] sm:$0xff]
    %v50 = vld [vmem:[#allocation5 + $0x58] sm:$0xff]
    %v51 = vld [vmem:[#allocation5 + $0x60] sm:$0x1]
    %v52 = vld [vmem:[#allocation5 + $0x68] sm:$0x1]
    %vm53 = vcmask 400384
    %v55 = vsel %vm53, %v38, 0
    %vm57 = vcmask 1040384
    %v59 = vsel %vm57, %v51, 0
    %v62 = vsel %vm57, %v52, 0
    %64 = vmatprep.subr.mxu0 %v40
    %65 = vmatpush1.msra.mxu0 %v39
    %66 = vmatprep.subr.mxu0 %v42
    %67 = vmatpush1.msra.mxu0 %v41
    %68 = vmatprep.subr.mxu0 %v44
    %69 = vmatpush1.msra.mxu0 %v43
    %70 = vmatprep.subr.mxu0 %v46
    %71 = vmatpush1.msra.mxu0 %v45
    %72 = vmatprep.subr.mxu0 %v48
    %73 = vmatpush1.msra.mxu0 %v47
    %74 = vmatprep.subr.mxu0 %v50
    %75 = vmatpush1.msra.mxu0 %v49
    %76 = vmatprep.subr.mxu0 %v62
    %77 = vmatpush1.msra.mxu0 %v59
    %78 = vmatprep.subr.mxu0 0.0
    %79 = vmatpush1.msra.mxu0 0.0
    %80 = vmatprep.subr.mxu0 0.0
    %81 = vmatpush1.msra.mxu0 0.0
    %82 = vmatprep.subr.mxu0 0.0
    %83 = vmatpush1.msra.mxu0 0.0
    %84 = vmatprep.subr.mxu0 0.0
    %85 = vmatpush1.msra.mxu0 0.0
    %86 = vmatprep.subr.mxu0 0.0
    %87 = vmatpush1.msra.mxu0 0.0
    %88 = vmatprep.subr.mxu0 0.0
    %89 = vmatpush1.msra.mxu0 0.0
    %90 = vmatprep.subr.mxu0 0.0
    %91 = vmatpush1.msra.mxu0 0.0
    %92 = vmatprep.subr.mxu0 0.0
    %93 = vmatpush1.msra.mxu0 0.0
    %94 = vmatprep.subr.mxu0 0.0
    %95 = vmatpush1.msra.mxu0 0.0
    %96 = vmatprep.subr.mxu0 0.0
    %97 = vmatpush1.msra.mxu0 0.0
    %98 = vmatprep.subr.mxu0 0.0
    %99 = vmatpush1.msra.mxu0 0.0
    %100 = vmatprep.subr.mxu0 0.0
    %101 = vmatpush1.msra.mxu0 0.0
    %102 = vmatprep.subr.mxu0 0.0
    %103 = vmatpush1.msra.mxu0 0.0
    %104 = vmatprep.subr.mxu0 0.0
    %105 = vmatpush1.msra.mxu0 0.0
    %106 = vmatprep.subr.mxu0 0.0
    %107 = vmatpush1.msra.mxu0 0.0
    %108 = vmatprep.subr.mxu0 0.0
    %109 = vmatpush1.msra.mxu0 0.0
    %110 = vmatprep.subr.mxu0 0.0
    %111 = vmatpush1.msra.mxu0 0.0
    %112 = vmatprep.subr.mxu0 0.0
    %113 = vmatpush1.msra.mxu0 0.0
    %114 = vmatprep.subr.mxu0 0.0
    %115 = vmatpush1.msra.mxu0 0.0
    %116 = vmatprep.subr.mxu0 0.0
    %117 = vmatpush1.msra.mxu0 0.0
    %118 = vmatprep.subr.mxu0 0.0
    %119 = vmatpush1.msra.mxu0 0.0
    %120 = vmatprep.subr.mxu0 0.0
    %121 = vmatpush1.msra.mxu0 0.0
    %122 = vmatprep.subr.mxu0 0.0
    %123 = vmatpush1.msra.mxu0 0.0
    %124 = vmatprep.subr.mxu0 0.0
    %125 = vmatpush1.msra.mxu0 0.0
    %126 = vmatprep.subr.mxu0 0.0
    %127 = vmatpush1.msra.mxu0 0.0
    %128 = vmatprep.mubr.f32.mxu0 0.0
    %129 = vmatmul.mubr.f32.gmra.mrb[0].mxu0 %v55
    %v130 = vpop.f32.mrb[0].mxu0
    %v131 = vadd.f32 0.0, %v130
    %v132 = vpop.f32.mrb[0].mxu0
    %v133 = vadd.f32 0.0, %v132
    %134 = vdwg.mxu0
    %135 = vst [vmem:[#allocation7] sm:$0xff] %v131
    %136 = vst [vmem:[#allocation7 + $0x8] sm:$0xff] %v133
    // Predicated region
    $region18: #{tpu_custom_call.1} parent=1 // pred_check
      _
    $region19: #{tpu_custom_call.1} parent=1 // pred_check_branch
      %138 = sbr.rel (0) target = $region21
    $region20: #{tpu_custom_call.1} parent=1 // pred_region
      %s140 = ssub.s32 256, 256
      %141 = vsyncadd [#allocation4], %s140
      %s143 = sshll.u32 [#allocation7], 4
      %s144 = int_to_ptr.vmem [resolvable:$true] %s143
      %146 = dma.vmem_to_hbm [thread:$0]  %s144, 256, %s2, [#allocation4]
    $region21: #{tpu_custom_call.1} parent=1 // pred_fallthru
      _
    // Predicated region
    $region22: #{tpu_custom_call.1} parent=1 // pred_check
      _
    $region23: #{tpu_custom_call.1} parent=1 // pred_check_branch
      %148 = sbr.rel (0) target = $region25
    $region24: #{tpu_custom_call.1} parent=1 // pred_region
      %149 = dma.done [#allocation4], 256
    $region25: #{tpu_custom_call.1} parent=1 // pred_fallthru
      _
    %150 = vsyncpa [#allocation3], 1
    %151 = vsyncpa [#allocation6], 1
    %152 = vsyncpa [#allocation4], 1

</llo_original>
